<compile_context>
chip_gen: v6e
topology: v6e:2x2x1
jax: 0.10.0
libtpu: 0.0.40
codegen_flags: <defaults>
</compile_context>

<pallas_src>
import math

import jax
import jax.numpy as jnp
from jax.experimental import pallas as pl
from jax.experimental.pallas import tpu as pltpu


def _round_up(x, m):
    return ((x + m - 1) // m) * m


def actor_td3_kernel(x_ref, w1_ref, w2_ref, w3_ref, b1_ref, b2_ref, b3_ref, out_ref):
    """Fused 3-layer MLP, feature-major.  x_ref: (state_dim, TB) f32 batch tile."""
    x_t = x_ref[...]                                                   # (S,  TB)
    h1 = jnp.dot(w1_ref[...], x_t, preferred_element_type=jnp.float32)  # (H,  TB)
    h1 = jnp.maximum(h1 + b1_ref[...], 0.0)                             # F.relu
    h2 = jnp.dot(w2_ref[...], h1, preferred_element_type=jnp.float32)   # (H2, TB)
    h2 = jnp.maximum(h2 + b2_ref[...], 0.0)                             # F.relu
    a = jnp.dot(w3_ref[...], h2, preferred_element_type=jnp.float32)    # (A8, TB)
    out_ref[...] = jnp.tanh(a + b3_ref[...]).astype(out_ref.dtype)      # torch.tanh


def _choose_batch_tile(batch, batch_tile):
    """Lane-axis batch tile: >=2 grid steps when feasible, 128-lane multiples."""
    if batch < 256:
        return batch  # single full-extent block; tiny RL batches
    half = _round_up(pl.cdiv(batch, 2), 128)
    return min(batch_tile, half)


def prepare_params(params):
    """One-time parameter prep (hoisted out of the per-call forward).

    params are in PyTorch layout: w* = [out, in], b* = [out].
    """
    w1, b1, w2, b2, w3, b3 = params
    action_dim = w3.shape[0]
    a_sub = _round_up(action_dim, 8)  # sublane-aligned output rows (pad rows -> tanh(0)=0)
    f32 = jnp.float32
    w1_t = w1.astype(f32)                                               # (H,  S)
    w2_t = w2.astype(f32)                                               # (H2, H)
    w3_t = jnp.pad(w3.astype(f32), ((0, a_sub - action_dim), (0, 0)))   # (A8, H2)
    b1c = b1.reshape(-1, 1).astype(f32)                                 # (H,  1)
    b2c = b2.reshape(-1, 1).astype(f32)                                 # (H2, 1)
    b3c = jnp.pad(b3.reshape(-1, 1).astype(f32), ((0, a_sub - action_dim), (0, 0)))
    return (w1_t, b1c, w2_t, b2c, w3_t, b3c, action_dim)


def actor_td3_forward(state, prepared, *, batch_tile=2048):
    """state: [B, state_dim] f32 -> action: [B, action_dim] f32."""
    w1_t, b1c, w2_t, b2c, w3_t, b3c, action_dim = prepared
    B, state_dim = state.shape
    hidden = w1_t.shape[0]
    h_half = w2_t.shape[0]
    a_sub = w3_t.shape[0]

    tb = _choose_batch_tile(B, batch_tile)
    grid = (pl.cdiv(B, tb),)

    # Cheap per-call transform: batch goes on the lane axis (small input stream).
    x_t = state.T                                                        # (S, B) f32

    out_t = pl.pallas_call(
        actor_td3_kernel,
        out_shape=jax.ShapeDtypeStruct((a_sub, B), jnp.float32),
        grid=grid,
        in_specs=[
            pl.BlockSpec((state_dim, tb), lambda i: (0, i)),    # state tile (streamed)
            pl.BlockSpec((hidden, state_dim), lambda i: (0, 0)),  # w1: VMEM-resident
            pl.BlockSpec((h_half, hidden), lambda i: (0, 0)),     # w2: VMEM-resident
            pl.BlockSpec((a_sub, h_half), lambda i: (0, 0)),      # w3: VMEM-resident
            pl.BlockSpec((hidden, 1), lambda i: (0, 0)),          # b1 column
            pl.BlockSpec((h_half, 1), lambda i: (0, 0)),          # b2 column
            pl.BlockSpec((a_sub, 1), lambda i: (0, 0)),           # b3 column
        ],
        out_specs=pl.BlockSpec((a_sub, tb), lambda i: (0, i)),
        compiler_params=pltpu.CompilerParams(
            dimension_semantics=("parallel",),
            vmem_limit_bytes=32 * 1024 * 1024,
        ),
    )(x_t, w1_t, w2_t, w3_t, b1c, b2c, b3c)

    # Drop padded action rows and return in the module's (batch, action_dim) layout.
    return out_t[:action_dim, :].T


def _kaiming_uniform(key, fan_in, shape):
    # PyTorch init.kaiming_uniform_(nonlinearity='relu'): bound = sqrt(2) * sqrt(3 / fan_in)
    bound = math.sqrt(2.0) * math.sqrt(3.0 / fan_in)
    return jax.random.uniform(key, shape, jnp.float32, -bound, bound)


def init_params(key, state_dim, action_dim, hidden_dim=256):
    """PyTorch-layout params: weights [out, in], biases [out] (zeros, per the module)."""
    k1, k2, k3 = jax.random.split(key, 3)
    h_half = hidden_dim // 2
    w1 = _kaiming_uniform(k1, state_dim, (hidden_dim, state_dim))
    b1 = jnp.zeros((hidden_dim,), jnp.float32)
    w2 = _kaiming_uniform(k2, hidden_dim, (h_half, hidden_dim))
    b2 = jnp.zeros((h_half,), jnp.float32)
    w3 = _kaiming_uniform(k3, h_half, (action_dim, h_half))
    b3 = jnp.zeros((action_dim,), jnp.float32)
    return (w1, b1, w2, b2, w3, b3)


if __name__ == "__main__":
    # TODO(synk): the `Timer(...)` context manager in the PyTorch forward is pure
    # instrumentation (no numerics), so it is intentionally not reproduced.
    key = jax.random.PRNGKey(0)
    state_dim, action_dim, hidden_dim = 16, 4, 32
    batch = 2

    pkey, skey = jax.random.split(key)
    params = init_params(pkey, state_dim, action_dim, hidden_dim)
    prepared = prepare_params(params)  # one-time weight prep (hoisted out of forward)
    state = jax.random.normal(skey, (batch, state_dim), jnp.float32)

    action = actor_td3_forward(state, prepared)
    jax.block_until_ready(action)

    # Pure-JAX f32 reference (PyTorch layout: y = x @ W.T + b).  The kernel now feeds
    # f32 into the MXU, so only default matmul-precision differences remain.
    w1, b1, w2, b2, w3, b3 = params
    h = jnp.maximum(state @ w1.T + b1, 0.0)
    h = jnp.maximum(h @ w2.T + b2, 0.0)
    ref = jnp.tanh(h @ w3.T + b3)
    assert action.shape == (batch, action_dim)
    assert jnp.allclose(action, ref, atol=1e-2, rtol=1e-2), "Pallas output mismatch vs reference"

    print("KERNEL_OK")
</pallas_src>

<mosaic_0001>
module attributes {stable_mosaic.version = 11 : i64} {
  func.func @actor_td3_kernel(%arg0: i32, %arg1: memref<16x2xf32, #tpu.memory_space<vmem>>, %arg2: memref<32x16xf32, #tpu.memory_space<vmem>>, %arg3: memref<16x32xf32, #tpu.memory_space<vmem>>, %arg4: memref<8x16xf32, #tpu.memory_space<vmem>>, %arg5: memref<32x1xf32, #tpu.memory_space<vmem>>, %arg6: memref<16x1xf32, #tpu.memory_space<vmem>>, %arg7: memref<8x1xf32, #tpu.memory_space<vmem>>, %arg8: memref<8x2xf32, #tpu.memory_space<vmem>>) attributes {dimension_semantics = [#tpu.dimension_semantics<parallel>], iteration_bounds = array<i64: 1>, scalar_prefetch = 0 : i64, scratch_operands = 0 : i64, tpu.core_type = #tpu.core_type<tc>, window_params = [{transform_indices = @transform_0, window_bounds = array<i64: 16, 2>}, {pipeline_mode = #tpu.pipeline_mode<synchronous>, transform_indices = @transform_1, window_bounds = array<i64: 32, 16>}, {pipeline_mode = #tpu.pipeline_mode<synchronous>, transform_indices = @transform_2, window_bounds = array<i64: 16, 32>}, {pipeline_mode = #tpu.pipeline_mode<synchronous>, transform_indices = @transform_3, window_bounds = array<i64: 8, 16>}, {pipeline_mode = #tpu.pipeline_mode<synchronous>, transform_indices = @transform_4, window_bounds = array<i64: 32, 1>}, {pipeline_mode = #tpu.pipeline_mode<synchronous>, transform_indices = @transform_5, window_bounds = array<i64: 16, 1>}, {pipeline_mode = #tpu.pipeline_mode<synchronous>, transform_indices = @transform_6, window_bounds = array<i64: 8, 1>}, {transform_indices = @transform_7, window_bounds = array<i64: 8, 2>}]} {
    %c0 = arith.constant 0 : index
    %c0_0 = arith.constant 0 : index
    %0 = vector.load %arg1[%c0, %c0_0] : memref<16x2xf32, #tpu.memory_space<vmem>>, vector<16x2xf32>
    %c0_1 = arith.constant 0 : index
    %c0_2 = arith.constant 0 : index
    %1 = vector.load %arg2[%c0_1, %c0_2] : memref<32x16xf32, #tpu.memory_space<vmem>>, vector<32x16xf32>
    %cst = arith.constant dense<0.000000e+00> : vector<32x2xf32>
    %2 = tpu.matmul %1, %0, %cst {dimension_numbers = #tpu.dot_dimension_numbers<[1], [0], [0], [1], [0, 0, 1, 1], [], []>} : vector<32x16xf32>, vector<16x2xf32>, vector<32x2xf32> -> vector<32x2xf32>
    %c0_3 = arith.constant 0 : index
    %c0_4 = arith.constant 0 : index
    %3 = vector.load %arg5[%c0_3, %c0_4] : memref<32x1xf32, #tpu.memory_space<vmem>>, vector<32x1xf32>
    %4 = vector.broadcast %3 : vector<32x1xf32> to vector<32x2xf32>
    %5 = arith.addf %2, %4 : vector<32x2xf32>
    %cst_5 = arith.constant 0.000000e+00 : f32
    %6 = vector.broadcast %cst_5 : f32 to vector<32x2xf32>
    %7 = arith.maximumf %5, %6 : vector<32x2xf32>
    %c0_6 = arith.constant 0 : index
    %c0_7 = arith.constant 0 : index
    %8 = vector.load %arg3[%c0_6, %c0_7] : memref<16x32xf32, #tpu.memory_space<vmem>>, vector<16x32xf32>
    %cst_8 = arith.constant dense<0.000000e+00> : vector<16x2xf32>
    %9 = tpu.matmul %8, %7, %cst_8 {dimension_numbers = #tpu.dot_dimension_numbers<[1], [0], [0], [1], [0, 0, 1, 1], [], []>} : vector<16x32xf32>, vector<32x2xf32>, vector<16x2xf32> -> vector<16x2xf32>
    %c0_9 = arith.constant 0 : index
    %c0_10 = arith.constant 0 : index
    %10 = vector.load %arg6[%c0_9, %c0_10] : memref<16x1xf32, #tpu.memory_space<vmem>>, vector<16x1xf32>
    %11 = vector.broadcast %10 : vector<16x1xf32> to vector<16x2xf32>
    %12 = arith.addf %9, %11 : vector<16x2xf32>
    %cst_11 = arith.constant 0.000000e+00 : f32
    %13 = vector.broadcast %cst_11 : f32 to vector<16x2xf32>
    %14 = arith.maximumf %12, %13 : vector<16x2xf32>
    %c0_12 = arith.constant 0 : index
    %c0_13 = arith.constant 0 : index
    %15 = vector.load %arg4[%c0_12, %c0_13] : memref<8x16xf32, #tpu.memory_space<vmem>>, vector<8x16xf32>
    %cst_14 = arith.constant dense<0.000000e+00> : vector<8x2xf32>
    %16 = tpu.matmul %15, %14, %cst_14 {dimension_numbers = #tpu.dot_dimension_numbers<[1], [0], [0], [1], [0, 0, 1, 1], [], []>} : vector<8x16xf32>, vector<16x2xf32>, vector<8x2xf32> -> vector<8x2xf32>
    %c0_15 = arith.constant 0 : index
    %c0_16 = arith.constant 0 : index
    %17 = vector.load %arg7[%c0_15, %c0_16] : memref<8x1xf32, #tpu.memory_space<vmem>>, vector<8x1xf32>
    %18 = vector.broadcast %17 : vector<8x1xf32> to vector<8x2xf32>
    %19 = arith.addf %16, %18 : vector<8x2xf32>
    %20 = math.tanh %19 : vector<8x2xf32>
    %c0_17 = arith.constant 0 : index
    %c0_18 = arith.constant 0 : index
    %21 = vector.load %arg8[%c0_17, %c0_18] : memref<8x2xf32, #tpu.memory_space<vmem>>, vector<8x2xf32>
    tpu.vector_store %arg8[%c0_17, %c0_18], %20 {strides = array<i32>} : memref<8x2xf32, #tpu.memory_space<vmem>>, vector<8x2xf32>,
    return
  }
  func.func @transform_0(%arg0: i32) -> (i32, i32) {
    %c0_i32 = arith.constant 0 : i32
    %c0_i32_0 = arith.constant 0 : i32
    return %c0_i32, %arg0 : i32, i32
  }
  func.func @transform_1(%arg0: i32) -> (i32, i32) {
    %c0_i32 = arith.constant 0 : i32
    %c0_i32_0 = arith.constant 0 : i32
    %c0_i32_1 = arith.constant 0 : i32
    return %c0_i32, %c0_i32_0 : i32, i32
  }
  func.func @transform_2(%arg0: i32) -> (i32, i32) {
    %c0_i32 = arith.constant 0 : i32
    %c0_i32_0 = arith.constant 0 : i32
    %c0_i32_1 = arith.constant 0 : i32
    return %c0_i32, %c0_i32_0 : i32, i32
  }
  func.func @transform_3(%arg0: i32) -> (i32, i32) {
    %c0_i32 = arith.constant 0 : i32
    %c0_i32_0 = arith.constant 0 : i32
    %c0_i32_1 = arith.constant 0 : i32
    return %c0_i32, %c0_i32_0 : i32, i32
  }
  func.func @transform_4(%arg0: i32) -> (i32, i32) {
    %c0_i32 = arith.constant 0 : i32
    %c0_i32_0 = arith.constant 0 : i32
    %c0_i32_1 = arith.constant 0 : i32
    return %c0_i32, %c0_i32_0 : i32, i32
  }
  func.func @transform_5(%arg0: i32) -> (i32, i32) {
    %c0_i32 = arith.constant 0 : i32
    %c0_i32_0 = arith.constant 0 : i32
    %c0_i32_1 = arith.constant 0 : i32
    return %c0_i32, %c0_i32_0 : i32, i32
  }
  func.func @transform_6(%arg0: i32) -> (i32, i32) {
    %c0_i32 = arith.constant 0 : i32
    %c0_i32_0 = arith.constant 0 : i32
    %c0_i32_1 = arith.constant 0 : i32
    return %c0_i32, %c0_i32_0 : i32, i32
  }
  func.func @transform_7(%arg0: i32) -> (i32, i32) {
    %c0_i32 = arith.constant 0 : i32
    %c0_i32_0 = arith.constant 0 : i32
    return %c0_i32, %arg0 : i32, i32
  }
}

</mosaic_0001>

<llo_original>
// kernel: tpu_custom_call.1
$region0: #{tpu_custom_call.1}
  #allocation0 [shape = 'u32[]', space=smem, size = 0x4, offset = 0x4, fixed_abs, tag = 'smem constant byte address 0x4 - core index']
  #allocation1 [shape = 'u32[144,128]{1,0:T(1,128)}', space=vmem, size = 0x12000, scoped, tag = 'internal scratch']
  %s0 = inlined_call_operand.vmem [shape: f32[16,2], index: 0, kind: input, shape index: {}]
  %s1 = inlined_call_operand.vmem [shape: f32[32,16], index: 1, kind: input, shape index: {}]
  %s2 = inlined_call_operand.vmem [shape: f32[16,32], index: 2, kind: input, shape index: {}]
  %s3 = inlined_call_operand.vmem [shape: f32[8,16], index: 3, kind: input, shape index: {}]
  %s4 = inlined_call_operand.vmem [shape: f32[32,1], index: 4, kind: input, shape index: {}]
  %s5 = inlined_call_operand.vmem [shape: f32[16,1], index: 5, kind: input, shape index: {}]
  %s6 = inlined_call_operand.vmem [shape: f32[8,1], index: 6, kind: input, shape index: {}]
  %s7 = inlined_call_operand.vmem [shape: f32[8,2], index: 7, kind: output, shape index: {}]
  %s8 = sld [smem:[#allocation0]]
  $region38: #{tpu_custom_call.1} parent=0
    _
  %s10 = ssub.s32 1, %s8
  %s11 = scalar_select 0, %s10, %s8
  // Predicated region
  $region2: #{tpu_custom_call.1} parent=0 // pred_check
    _
  $region3: #{tpu_custom_call.1} parent=0 // pred_check_branch
    %13 = sbr.rel (0) target = $region5
  $region4: #{tpu_custom_call.1} parent=0 // pred_region
    _
  $region5: #{tpu_custom_call.1} parent=0 // pred_fallthru
    _
  // Predicated region
  $region6: #{tpu_custom_call.1} parent=0 // pred_check
    _
  $region7: #{tpu_custom_call.1} parent=0 // pred_check_branch
    %15 = sbr.rel (0) target = $region9
  $region8: #{tpu_custom_call.1} parent=0 // pred_region
    _
  $region9: #{tpu_custom_call.1} parent=0 // pred_fallthru
    _
  // Predicated region
  $region10: #{tpu_custom_call.1} parent=0 // pred_check
    _
  $region11: #{tpu_custom_call.1} parent=0 // pred_check_branch
    %17 = sbr.rel (0) target = $region13
  $region12: #{tpu_custom_call.1} parent=0 // pred_region
    _
  $region13: #{tpu_custom_call.1} parent=0 // pred_fallthru
    _
  // Predicated region
  $region14: #{tpu_custom_call.1} parent=0 // pred_check
    _
  $region15: #{tpu_custom_call.1} parent=0 // pred_check_branch
    %19 = sbr.rel (0) target = $region17
  $region16: #{tpu_custom_call.1} parent=0 // pred_region
    _
  $region17: #{tpu_custom_call.1} parent=0 // pred_fallthru
    _
  // Predicated region
  $region18: #{tpu_custom_call.1} parent=0 // pred_check
    _
  $region19: #{tpu_custom_call.1} parent=0 // pred_check_branch
    %21 = sbr.rel (0) target = $region21
  $region20: #{tpu_custom_call.1} parent=0 // pred_region
    _
  $region21: #{tpu_custom_call.1} parent=0 // pred_fallthru
    _
  // Predicated region
  $region22: #{tpu_custom_call.1} parent=0 // pred_check
    _
  $region23: #{tpu_custom_call.1} parent=0 // pred_check_branch
    %23 = sbr.rel (0) target = $region25
  $region24: #{tpu_custom_call.1} parent=0 // pred_region
    _
  $region25: #{tpu_custom_call.1} parent=0 // pred_fallthru
    _
  // Predicated region
  $region26: #{tpu_custom_call.1} parent=0 // pred_check
    _
  $region27: #{tpu_custom_call.1} parent=0 // pred_check_branch
    %25 = sbr.rel (0) target = $region29
  $region28: #{tpu_custom_call.1} parent=0 // pred_region
    _
  $region29: #{tpu_custom_call.1} parent=0 // pred_fallthru
    _
  %v26 = vld [vmem:[%s0] sm:$0xff]
  %v27 = vld [vmem:[%s0 + $0x8] sm:$0xff]
  %v28 = vld [vmem:[%s1] sm:$0xff]
  %v29 = vld [vmem:[%s1 + $0x8] sm:$0xff]
  %v30 = vld [vmem:[%s1 + $0x10] sm:$0xff]
  %v31 = vld [vmem:[%s1 + $0x18] sm:$0xff]
  %v32 = vld [vmem:[%s4] sm:$0xff]
  %v33 = vld [vmem:[%s4 + $0x8] sm:$0xff]
  %v34 = vld [vmem:[%s4 + $0x10] sm:$0xff]
  %v35 = vld [vmem:[%s4 + $0x18] sm:$0xff]
  %37 = vset.pattern.permute.xlu0 0
  %38 = vperm.xlu0 %37, %v32
  %v39 = vpop.permute.xlu0 %38
  %42 = vset.pattern.permute.xlu0 0
  %43 = vperm.xlu0 %42, %v33
  %v44 = vpop.permute.xlu0 %43
  %47 = vset.pattern.permute.xlu0 0
  %48 = vperm.xlu0 %47, %v34
  %v49 = vpop.permute.xlu0 %48
  %52 = vset.pattern.permute.xlu0 0
  %53 = vperm.xlu0 %52, %v35
  %v54 = vpop.permute.xlu0 %53
  %vm56 = vcmask 130048
  %v58 = vsel %vm56, %v28, 0
  %v61 = vsel %vm56, %v29, 0
  %v64 = vsel %vm56, %v30, 0
  %v67 = vsel %vm56, %v31, 0
  %69 = vmatprep.subr.mxu0 0.0
  %70 = vmatpush1.msra.mxu0 0.0
  %71 = vmatprep.subr.mxu0 0.0
  %72 = vmatpush1.msra.mxu0 0.0
  %73 = vmatprep.subr.mxu0 0.0
  %74 = vmatpush1.msra.mxu0 0.0
  %75 = vmatprep.subr.mxu0 0.0
  %76 = vmatpush1.msra.mxu0 0.0
  %77 = vmatprep.subr.mxu0 0.0
  %78 = vmatpush1.msra.mxu0 0.0
  %79 = vmatprep.subr.mxu0 0.0
  %80 = vmatpush1.msra.mxu0 0.0
  %81 = vmatprep.subr.mxu0 0.0
  %82 = vmatpush1.msra.mxu0 0.0
  %83 = vmatprep.subr.mxu0 0.0
  %84 = vmatpush1.msra.mxu0 0.0
  %85 = vmatprep.subr.mxu0 0.0
  %86 = vmatpush1.msra.mxu0 0.0
  %87 = vmatprep.subr.mxu0 0.0
  %88 = vmatpush1.msra.mxu0 0.0
  %89 = vmatprep.subr.mxu0 0.0
  %90 = vmatpush1.msra.mxu0 0.0
  %91 = vmatprep.subr.mxu0 0.0
  %92 = vmatpush1.msra.mxu0 0.0
  %93 = vmatprep.subr.mxu0 0.0
  %94 = vmatpush1.msra.mxu0 0.0
  %95 = vmatprep.subr.mxu0 0.0
  %96 = vmatpush1.msra.mxu0 0.0
  %97 = vmatprep.subr.mxu0 0.0
  %98 = vmatpush1.msra.mxu0 %v27
  %99 = vmatprep.subr.mxu0 0.0
  %100 = vmatpush1.msra.mxu0 %v26
  %101 = vmatprep.subr.mxu0 0.0
  %102 = vmatpush2.msra.mxu0 0.0
  %103 = vmatprep.subr.mxu0 0.0
  %104 = vmatpush2.msra.mxu0 0.0
  %105 = vmatprep.subr.mxu0 0.0
  %106 = vmatpush2.msra.mxu0 0.0
  %107 = vmatprep.subr.mxu0 0.0
  %108 = vmatpush2.msra.mxu0 0.0
  %109 = vmatprep.subr.mxu0 0.0
  %110 = vmatpush2.msra.mxu0 0.0
  %111 = vmatprep.subr.mxu0 0.0
  %112 = vmatpush2.msra.mxu0 0.0
  %113 = vmatprep.subr.mxu0 0.0
  %114 = vmatpush2.msra.mxu0 0.0
  %115 = vmatprep.subr.mxu0 0.0
  %116 = vmatpush2.msra.mxu0 0.0
  %117 = vmatprep.subr.mxu0 0.0
  %118 = vmatpush2.msra.mxu0 0.0
  %119 = vmatprep.subr.mxu0 0.0
  %120 = vmatpush2.msra.mxu0 0.0
  %121 = vmatprep.subr.mxu0 0.0
  %122 = vmatpush2.msra.mxu0 0.0
  %123 = vmatprep.subr.mxu0 0.0
  %124 = vmatpush2.msra.mxu0 0.0
  %125 = vmatprep.subr.mxu0 0.0
  %126 = vmatpush2.msra.mxu0 0.0
  %127 = vmatprep.subr.mxu0 0.0
  %128 = vmatpush2.msra.mxu0 0.0
  %129 = vmatprep.subr.mxu0 0.0
  %130 = vmatpush2.msra.mxu0 0.0
  %131 = vmatprep.subr.mxu0 0.0
  %132 = vmatpush2.msra.mxu0 0.0
  %133 = vmatprep.mubr.f32.mxu0 0.0
  %134 = vmatmul.mubr.f32.gmra.mxu0 %v58
  %v135 = vpop.f32.mrf.mxu0
  %v136 = vadd.f32 %v39, %v135
  %v137 = vpop.f32.mrf.mxu0
  %138 = vmatprep.mubr.f32.mxu0 0.0
  %139 = vmatmul.mubr.f32.gmra.mxu0 %v61
  %v140 = vpop.f32.mrf.mxu0
  %v141 = vadd.f32 %v44, %v140
  %v142 = vpop.f32.mrf.mxu0
  %143 = vmatprep.mubr.f32.mxu0 0.0
  %144 = vmatmul.mubr.f32.gmra.mxu0 %v64
  %v145 = vpop.f32.mrf.mxu0
  %v146 = vadd.f32 %v49, %v145
  %v147 = vpop.f32.mrf.mxu0
  %148 = vmatprep.mubr.f32.mxu0 0.0
  %149 = vmatmul.mubr.f32.gmra.mxu0 %v67
  %v150 = vpop.f32.mrf.mxu0
  %v151 = vadd.f32 %v54, %v150
  %v152 = vpop.f32.mrf.mxu0
  %153 = vdwg.mxu0
  %v154 = vmax.f32 %v136, 0.0
  %v155 = vmax.f32 %v141, 0.0
  %v156 = vmax.f32 %v146, 0.0
  %v157 = vmax.f32 %v151, 0.0
  %v158 = vld [vmem:[%s2] sm:$0xff]
  %v159 = vld [vmem:[%s2 + $0x8] sm:$0xff]
  %v160 = vld [vmem:[%s5] sm:$0xff]
  %v161 = vld [vmem:[%s5 + $0x8] sm:$0xff]
  %163 = vset.pattern.permute.xlu0 0
  %164 = vperm.xlu0 %163, %v160
  %v165 = vpop.permute.xlu0 %164
  %168 = vset.pattern.permute.xlu0 0
  %169 = vperm.xlu0 %168, %v161
  %v170 = vpop.permute.xlu0 %169
  %vm172 = vcmask 261120
  %v174 = vsel %vm172, %v158, 0
  %v177 = vsel %vm172, %v159, 0
  %179 = vmatprep.subr.mxu0 0.0
  %180 = vmatpush1.msra.mxu0 0.0
  %181 = vmatprep.subr.mxu0 0.0
  %182 = vmatpush1.msra.mxu0 0.0
  %183 = vmatprep.subr.mxu0 0.0
  %184 = vmatpush1.msra.mxu0 0.0
  %185 = vmatprep.subr.mxu0 0.0
  %186 = vmatpush1.msra.mxu0 0.0
  %187 = vmatprep.subr.mxu0 0.0
  %188 = vmatpush1.msra.mxu0 0.0
  %189 = vmatprep.subr.mxu0 0.0
  %190 = vmatpush1.msra.mxu0 0.0
  %191 = vmatprep.subr.mxu0 0.0
  %192 = vmatpush1.msra.mxu0 0.0
  %193 = vmatprep.subr.mxu0 0.0
  %194 = vmatpush1.msra.mxu0 0.0
  %195 = vmatprep.subr.mxu0 0.0
  %196 = vmatpush1.msra.mxu0 0.0
  %197 = vmatprep.subr.mxu0 0.0
  %198 = vmatpush1.msra.mxu0 0.0
  %199 = vmatprep.subr.mxu0 0.0
  %200 = vmatpush1.msra.mxu0 0.0
  %201 = vmatprep.subr.mxu0 0.0
  %202 = vmatpush1.msra.mxu0 0.0
  %203 = vmatprep.subr.mxu0 0.0
  %204 = vmatpush1.msra.mxu0 %v157
  %205 = vmatprep.subr.mxu0 0.0
  %206 = vmatpush1.msra.mxu0 %v156
  %207 = vmatprep.subr.mxu0 0.0
  %208 = vmatpush1.msra.mxu0 %v155
  %209 = vmatprep.subr.mxu0 0.0
  %210 = vmatpush1.msra.mxu0 %v154
  %211 = vmatprep.subr.mxu0 0.0
  %212 = vmatpush2.msra.mxu0 0.0
  %213 = vmatprep.subr.mxu0 0.0
  %214 = vmatpush2.msra.mxu0 0.0
  %215 = vmatprep.subr.mxu0 0.0
  %216 = vmatpush2.msra.mxu0 0.0
  %217 = vmatprep.subr.mxu0 0.0
  %218 = vmatpush2.msra.mxu0 0.0
  %219 = vmatprep.subr.mxu0 0.0
  %220 = vmatpush2.msra.mxu0 0.0
  %221 = vmatprep.subr.mxu0 0.0
  %222 = vmatpush2.msra.mxu0 0.0
  %223 = vmatprep.subr.mxu0 0.0
  %224 = vmatpush2.msra.mxu0 0.0
  %225 = vmatprep.subr.mxu0 0.0
  %226 = vmatpush2.msra.mxu0 0.0
  %227 = vmatprep.subr.mxu0 0.0
  %228 = vmatpush2.msra.mxu0 0.0
  %229 = vmatprep.subr.mxu0 0.0
  %230 = vmatpush2.msra.mxu0 0.0
  %231 = vmatprep.subr.mxu0 0.0
  %232 = vmatpush2.msra.mxu0 0.0
  %233 = vmatprep.subr.mxu0 0.0
  %234 = vmatpush2.msra.mxu0 0.0
  %235 = vmatprep.subr.mxu0 0.0
  %236 = vmatpush2.msra.mxu0 0.0
  %237 = vmatprep.subr.mxu0 0.0
  %238 = vmatpush2.msra.mxu0 0.0
  %239 = vmatprep.subr.mxu0 0.0
  %240 = vmatpush2.msra.mxu0 0.0
  %241 = vmatprep.subr.mxu0 0.0
  %242 = vmatpush2.msra.mxu0 0.0
  %243 = vmatprep.mubr.f32.mxu0 0.0
  %244 = vmatmul.mubr.f32.gmra.mxu0 %v174
  %v245 = vpop.f32.mrf.mxu0
  %v246 = vadd.f32 %v165, %v245
  %v247 = vpop.f32.mrf.mxu0
  %248 = vmatprep.mubr.f32.mxu0 0.0
  %249 = vmatmul.mubr.f32.gmra.mxu0 %v177
  %v250 = vpop.f32.mrf.mxu0
  %v251 = vadd.f32 %v170, %v250
  %v252 = vpop.f32.mrf.mxu0
  %253 = vdwg.mxu0
  %v254 = vmax.f32 %v246, 0.0
  %v255 = vmax.f32 %v251, 0.0
  %v256 = vld [vmem:[%s3] sm:$0xff]
  %v257 = vld [vmem:[%s6] sm:$0xff]
  %259 = vset.pattern.permute.xlu0 0
  %260 = vperm.xlu0 %259, %v257
  %v261 = vpop.permute.xlu0 %260
  %v264 = vsel %vm56, %v256, 0
  %266 = vmatprep.subr.mxu0 0.0
  %267 = vmatpush1.msra.mxu0 0.0
  %268 = vmatprep.subr.mxu0 0.0
  %269 = vmatpush1.msra.mxu0 0.0
  %270 = vmatprep.subr.mxu0 0.0
  %271 = vmatpush1.msra.mxu0 0.0
  %272 = vmatprep.subr.mxu0 0.0
  %273 = vmatpush1.msra.mxu0 0.0
  %274 = vmatprep.subr.mxu0 0.0
  %275 = vmatpush1.msra.mxu0 0.0
  %276 = vmatprep.subr.mxu0 0.0
  %277 = vmatpush1.msra.mxu0 0.0
  %278 = vmatprep.subr.mxu0 0.0
  %279 = vmatpush1.msra.mxu0 0.0
  %280 = vmatprep.subr.mxu0 0.0
  %281 = vmatpush1.msra.mxu0 0.0
  %282 = vmatprep.subr.mxu0 0.0
  %283 = vmatpush1.msra.mxu0 0.0
  %284 = vmatprep.subr.mxu0 0.0
  %285 = vmatpush1.msra.mxu0 0.0
  %286 = vmatprep.subr.mxu0 0.0
  %287 = vmatpush1.msra.mxu0 0.0
  %288 = vmatprep.subr.mxu0 0.0
  %289 = vmatpush1.msra.mxu0 0.0
  %290 = vmatprep.subr.mxu0 0.0
  %291 = vmatpush1.msra.mxu0 0.0
  %292 = vmatprep.subr.mxu0 0.0
  %293 = vmatpush1.msra.mxu0 0.0
  %294 = vmatprep.subr.mxu0 0.0
  %295 = vmatpush1.msra.mxu0 %v255
  %296 = vmatprep.subr.mxu0 0.0
  %297 = vmatpush1.msra.mxu0 %v254
  %298 = vmatprep.subr.mxu0 0.0
  %299 = vmatpush2.msra.mxu0 0.0
  %300 = vmatprep.subr.mxu0 0.0
  %301 = vmatpush2.msra.mxu0 0.0
  %302 = vmatprep.subr.mxu0 0.0
  %303 = vmatpush2.msra.mxu0 0.0
  %304 = vmatprep.subr.mxu0 0.0
  %305 = vmatpush2.msra.mxu0 0.0
  %306 = vmatprep.subr.mxu0 0.0
  %307 = vmatpush2.msra.mxu0 0.0
  %308 = vmatprep.subr.mxu0 0.0
  %309 = vmatpush2.msra.mxu0 0.0
  %310 = vmatprep.subr.mxu0 0.0
  %311 = vmatpush2.msra.mxu0 0.0
  %312 = vmatprep.subr.mxu0 0.0
  %313 = vmatpush2.msra.mxu0 0.0
  %314 = vmatprep.subr.mxu0 0.0
  %315 = vmatpush2.msra.mxu0 0.0
  %316 = vmatprep.subr.mxu0 0.0
  %317 = vmatpush2.msra.mxu0 0.0
  %318 = vmatprep.subr.mxu0 0.0
  %319 = vmatpush2.msra.mxu0 0.0
  %320 = vmatprep.subr.mxu0 0.0
  %321 = vmatpush2.msra.mxu0 0.0
  %322 = vmatprep.subr.mxu0 0.0
  %323 = vmatpush2.msra.mxu0 0.0
  %324 = vmatprep.subr.mxu0 0.0
  %325 = vmatpush2.msra.mxu0 0.0
  %326 = vmatprep.subr.mxu0 0.0
  %327 = vmatpush2.msra.mxu0 0.0
  %328 = vmatprep.subr.mxu0 0.0
  %329 = vmatpush2.msra.mxu0 0.0
  %330 = vmatprep.mubr.f32.mxu0 0.0
  %331 = vmatmul.mubr.f32.gmra.mxu0 %v264
  %v332 = vpop.f32.mrf.mxu0
  %v333 = vadd.f32 %v261, %v332
  %v334 = vpop.f32.mrf.mxu0
  %335 = vdwg.mxu0
  %v336 = vtanh.pop %v333
  %vm337 = vcmask 15360
  %338 = vst.msk [vmem:[%s7] sm:$0xff] %vm337, %v336
  // Predicated region
  $region30: #{tpu_custom_call.1} parent=0 // pred_check
    _
  $region31: #{tpu_custom_call.1} parent=0 // pred_check_branch
    %340 = sbr.rel (0) target = $region33
  $region32: #{tpu_custom_call.1} parent=0 // pred_region
    _
  $region33: #{tpu_custom_call.1} parent=0 // pred_fallthru
    _
  // Predicated region
  $region34: #{tpu_custom_call.1} parent=0 // pred_check
    _
  $region35: #{tpu_custom_call.1} parent=0 // pred_check_branch
    %342 = sbr.rel (0) target = $region37
  $region36: #{tpu_custom_call.1} parent=0 // pred_region
    _
  $region37: #{tpu_custom_call.1} parent=0 // pred_fallthru
    _

</llo_original>
